<compile_context>
chip_gen: v7x
topology: tpu7x:2x2x1
jax: 0.10.0
libtpu: 0.0.40
codegen_flags: <defaults>
</compile_context>

<pallas_src>
import functools

import jax
import jax.numpy as jnp
from jax.experimental import pallas as pl
from jax.experimental.pallas import tpu as pltpu

IN_FEATURES = 9
HIDDEN = 70
HIDDEN_PAD = 128        # lane-dense padded hidden width
OUT_CLASSES = 2


def _round_up(n, m):
    return ((n + m - 1) // m) * m


def mlp_kernel(x_ref,
               w1_ref, b1_ref, w2_ref, b2_ref, w3_ref, b3_ref, w4_ref, b4_ref,
               o_ref):
    """Fused forward for one batch tile: 3x (Linear+ReLU) -> Linear -> softmax(dim=-1)."""
    # bf16 operands for the MXU, f32 accumulation.
    x = x_ref[...].astype(jnp.bfloat16)                                   # (TB, 9)

    h = jnp.dot(x, w1_ref[...], preferred_element_type=jnp.float32) + b1_ref[...]
    h = jnp.maximum(h, 0.0)                                               # (TB, 128)

    h = jnp.dot(h.astype(jnp.bfloat16), w2_ref[...],
                preferred_element_type=jnp.float32) + b2_ref[...]
    h = jnp.maximum(h, 0.0)

    # dropout1 (p=0.1): identity at inference.
    h = jnp.dot(h.astype(jnp.bfloat16), w3_ref[...],
                preferred_element_type=jnp.float32) + b3_ref[...]
    h = jnp.maximum(h, 0.0)

    logits = jnp.dot(h.astype(jnp.bfloat16), w4_ref[...],
                     preferred_element_type=jnp.float32) + b4_ref[...]    # (TB, 2)

    # Numerically-stable softmax over the 2 classes; reciprocal on the EUP.
    m = jnp.max(logits, axis=-1, keepdims=True)
    e = jnp.exp(logits - m)
    inv = pl.reciprocal(jnp.sum(e, axis=-1, keepdims=True), approx=True)
    o_ref[...] = (e * inv).astype(o_ref.dtype)


@functools.partial(jax.jit, static_argnames=("tile_b",))
def mymodule8_forward(x, packed_params, *, tile_b=1024):
    """x: (B, 9) float32. packed_params: output of pack_params()."""
    B, F = x.shape
    assert F == IN_FEATURES, f"expected {IN_FEATURES} input features, got {F}"
    w1, b1, w2, b2, w3, b3, w4, b4 = packed_params

    # Tile the batch (multiple of 8 sublanes); clamp for small batches.
    tile_b = _round_up(max(8, min(tile_b, _round_up(B, 8))), 8)
    num_tiles = pl.cdiv(B, tile_b)

    const = lambda i: (0, 0)          # weights/biases: same block every grid step
    in_specs = [
        pl.BlockSpec((tile_b, IN_FEATURES), lambda i: (i, 0)),   # x tile
        pl.BlockSpec(w1.shape, const), pl.BlockSpec(b1.shape, const),
        pl.BlockSpec(w2.shape, const), pl.BlockSpec(b2.shape, const),
        pl.BlockSpec(w3.shape, const), pl.BlockSpec(b3.shape, const),
        pl.BlockSpec(w4.shape, const), pl.BlockSpec(b4.shape, const),
    ]
    out_specs = pl.BlockSpec((tile_b, OUT_CLASSES), lambda i: (i, 0))

    flops = 2 * B * (IN_FEATURES * HIDDEN_PAD
                     + 2 * HIDDEN_PAD * HIDDEN_PAD
                     + HIDDEN_PAD * OUT_CLASSES)
    param_bytes = sum(int(p.size) * p.dtype.itemsize for p in packed_params)
    bytes_accessed = B * (IN_FEATURES + OUT_CLASSES) * 4 + param_bytes

    return pl.pallas_call(
        mlp_kernel,
        out_shape=jax.ShapeDtypeStruct((B, OUT_CLASSES), jnp.float32),
        grid=(num_tiles,),
        in_specs=in_specs,
        out_specs=out_specs,
        compiler_params=pltpu.CompilerParams(
            dimension_semantics=("parallel",),        # megacore on v7x; no-op on v5e/v6e
            vmem_limit_bytes=32 * 1024 * 1024,
        ),
        cost_estimate=pl.CostEstimate(
            flops=flops,
            transcendentals=3 * B,
            bytes_accessed=bytes_accessed,
        ),
    )(x, w1, b1, w2, b2, w3, b3, w4, b4)


def init_params(key):
    """Xavier-uniform weights, zero biases (default branch of MyModule8.init_module)."""
    dims = [(IN_FEATURES, HIDDEN), (HIDDEN, HIDDEN), (HIDDEN, HIDDEN), (HIDDEN, OUT_CLASSES)]
    weights, biases = [], []
    for fan_in, fan_out in dims:
        key, wk = jax.random.split(key)
        limit = jnp.sqrt(6.0 / (fan_in + fan_out))
        # stored transposed relative to torch's (out, in): here (in, out)
        weights.append(jax.random.uniform(wk, (fan_in, fan_out), jnp.float32, -limit, limit))
        biases.append(jnp.zeros((1, fan_out), jnp.float32))   # constant_(bias, 0.0)
    return weights, biases


def pack_params(weights, biases):
    """Zero-pad hidden dims to 128 lanes and cast weights to bf16 (biases stay f32)."""
    w1, w2, w3, w4 = weights
    b1, b2, b3, b4 = biases

    def pad_to(a, shape):
        out = jnp.zeros(shape, a.dtype)
        return out.at[:a.shape[0], :a.shape[1]].set(a)

    w1p = pad_to(w1, (IN_FEATURES, HIDDEN_PAD)).astype(jnp.bfloat16)
    w2p = pad_to(w2, (HIDDEN_PAD, HIDDEN_PAD)).astype(jnp.bfloat16)
    w3p = pad_to(w3, (HIDDEN_PAD, HIDDEN_PAD)).astype(jnp.bfloat16)
    w4p = pad_to(w4, (HIDDEN_PAD, OUT_CLASSES)).astype(jnp.bfloat16)
    b1p = pad_to(b1, (1, HIDDEN_PAD))
    b2p = pad_to(b2, (1, HIDDEN_PAD))
    b3p = pad_to(b3, (1, HIDDEN_PAD))
    b4p = b4
    return (w1p, b1p, w2p, b2p, w3p, b3p, w4p, b4p)


def reference_forward(x, weights, biases):
    """Pure-JAX f32 reference with the original (unpadded) parameters."""
    w1, w2, w3, w4 = weights
    b1, b2, b3, b4 = biases
    h = jnp.maximum(x @ w1 + b1, 0.0)
    h = jnp.maximum(h @ w2 + b2, 0.0)
    h = jnp.maximum(h @ w3 + b3, 0.0)      # dropout1 is identity at inference
    return jax.nn.softmax(h @ w4 + b4, axis=-1)


if __name__ == "__main__":
    key = jax.random.PRNGKey(0)
    pkey, xkey = jax.random.split(key)

    weights, biases = init_params(pkey)
    packed = pack_params(weights, biases)

    # Main check: batch large enough to exercise a multi-step (pipelined) grid.
    batch = 256
    x = jax.random.normal(xkey, (batch, IN_FEATURES), dtype=jnp.float32)
    out = jax.block_until_ready(mymodule8_forward(x, packed, tile_b=128))
    ref = reference_forward(x, weights, biases)
    assert out.shape == (batch, OUT_CLASSES)
    # bf16 MXU operands + approx reciprocal -> loosened tolerance vs the f32 reference.
    assert jnp.allclose(out, ref, atol=2e-2, rtol=2e-2), "mismatch vs pure-JAX reference"
    assert jnp.allclose(jnp.sum(out, axis=-1), 1.0, atol=2e-2), "softmax rows must sum to ~1"

    # Small-batch check (tile clamps, single grid step).
    x_small = x[:8]
    out_small = jax.block_until_ready(mymodule8_forward(x_small, packed))
    ref_small = reference_forward(x_small, weights, biases)
    assert jnp.allclose(out_small, ref_small, atol=2e-2, rtol=2e-2), "small-batch mismatch"

    print("KERNEL_OK")
</pallas_src>

<mosaic_0001>
module attributes {stable_mosaic.version = 11 : i64} {
  func.func @mlp_kernel(%arg0: i32, %arg1: memref<128x9xf32, #tpu.memory_space<vmem>>, %arg2: memref<9x128xbf16, #tpu.memory_space<vmem>>, %arg3: memref<1x128xf32, #tpu.memory_space<vmem>>, %arg4: memref<128x128xbf16, #tpu.memory_space<vmem>>, %arg5: memref<1x128xf32, #tpu.memory_space<vmem>>, %arg6: memref<128x128xbf16, #tpu.memory_space<vmem>>, %arg7: memref<1x128xf32, #tpu.memory_space<vmem>>, %arg8: memref<128x2xbf16, #tpu.memory_space<vmem>>, %arg9: memref<1x2xf32, #tpu.memory_space<vmem>>, %arg10: memref<128x2xf32, #tpu.memory_space<vmem>>) attributes {dimension_semantics = [#tpu.dimension_semantics<parallel>], iteration_bounds = array<i64: 2>, scalar_prefetch = 0 : i64, scratch_operands = 0 : i64, tpu.core_type = #tpu.core_type<tc>, window_params = [{transform_indices = @transform_0, window_bounds = array<i64: 128, 9>}, {pipeline_mode = #tpu.pipeline_mode<synchronous>, transform_indices = @transform_1, window_bounds = array<i64: 9, 128>}, {pipeline_mode = #tpu.pipeline_mode<synchronous>, transform_indices = @transform_2, window_bounds = array<i64: 1, 128>}, {pipeline_mode = #tpu.pipeline_mode<synchronous>, transform_indices = @transform_3, window_bounds = array<i64: 128, 128>}, {pipeline_mode = #tpu.pipeline_mode<synchronous>, transform_indices = @transform_4, window_bounds = array<i64: 1, 128>}, {pipeline_mode = #tpu.pipeline_mode<synchronous>, transform_indices = @transform_5, window_bounds = array<i64: 128, 128>}, {pipeline_mode = #tpu.pipeline_mode<synchronous>, transform_indices = @transform_6, window_bounds = array<i64: 1, 128>}, {pipeline_mode = #tpu.pipeline_mode<synchronous>, transform_indices = @transform_7, window_bounds = array<i64: 128, 2>}, {pipeline_mode = #tpu.pipeline_mode<synchronous>, transform_indices = @transform_8, window_bounds = array<i64: 1, 2>}, {transform_indices = @transform_9, window_bounds = array<i64: 128, 2>}]} {
    %c0 = arith.constant 0 : index
    %c0_0 = arith.constant 0 : index
    %0 = vector.load %arg1[%c0, %c0_0] : memref<128x9xf32, #tpu.memory_space<vmem>>, vector<128x9xf32>
    %1 = arith.truncf %0 : vector<128x9xf32> to vector<128x9xbf16>
    %c0_1 = arith.constant 0 : index
    %c0_2 = arith.constant 0 : index
    %2 = vector.load %arg2[%c0_1, %c0_2] : memref<9x128xbf16, #tpu.memory_space<vmem>>, vector<9x128xbf16>
    %cst = arith.constant dense<0.000000e+00> : vector<128x128xf32>
    %3 = tpu.matmul %1, %2, %cst {dimension_numbers = #tpu.dot_dimension_numbers<[1], [0], [0], [1], [0, 0, 1, 1], [], []>} : vector<128x9xbf16>, vector<9x128xbf16>, vector<128x128xf32> -> vector<128x128xf32>
    %c0_3 = arith.constant 0 : index
    %c0_4 = arith.constant 0 : index
    %4 = vector.load %arg3[%c0_3, %c0_4] : memref<1x128xf32, #tpu.memory_space<vmem>>, vector<1x128xf32>
    %5 = vector.broadcast %4 : vector<1x128xf32> to vector<128x128xf32>
    %6 = arith.addf %3, %5 : vector<128x128xf32>
    %cst_5 = arith.constant 0.000000e+00 : f32
    %7 = vector.broadcast %cst_5 : f32 to vector<128x128xf32>
    %8 = arith.maximumf %6, %7 : vector<128x128xf32>
    %9 = arith.truncf %8 : vector<128x128xf32> to vector<128x128xbf16>
    %c0_6 = arith.constant 0 : index
    %c0_7 = arith.constant 0 : index
    %10 = vector.load %arg4[%c0_6, %c0_7] : memref<128x128xbf16, #tpu.memory_space<vmem>>, vector<128x128xbf16>
    %cst_8 = arith.constant dense<0.000000e+00> : vector<128x128xf32>
    %11 = tpu.matmul %9, %10, %cst_8 {dimension_numbers = #tpu.dot_dimension_numbers<[1], [0], [0], [1], [0, 0, 1, 1], [], []>} : vector<128x128xbf16>, vector<128x128xbf16>, vector<128x128xf32> -> vector<128x128xf32>
    %c0_9 = arith.constant 0 : index
    %c0_10 = arith.constant 0 : index
    %12 = vector.load %arg5[%c0_9, %c0_10] : memref<1x128xf32, #tpu.memory_space<vmem>>, vector<1x128xf32>
    %13 = vector.broadcast %12 : vector<1x128xf32> to vector<128x128xf32>
    %14 = arith.addf %11, %13 : vector<128x128xf32>
    %cst_11 = arith.constant 0.000000e+00 : f32
    %15 = vector.broadcast %cst_11 : f32 to vector<128x128xf32>
    %16 = arith.maximumf %14, %15 : vector<128x128xf32>
    %17 = arith.truncf %16 : vector<128x128xf32> to vector<128x128xbf16>
    %c0_12 = arith.constant 0 : index
    %c0_13 = arith.constant 0 : index
    %18 = vector.load %arg6[%c0_12, %c0_13] : memref<128x128xbf16, #tpu.memory_space<vmem>>, vector<128x128xbf16>
    %cst_14 = arith.constant dense<0.000000e+00> : vector<128x128xf32>
    %19 = tpu.matmul %17, %18, %cst_14 {dimension_numbers = #tpu.dot_dimension_numbers<[1], [0], [0], [1], [0, 0, 1, 1], [], []>} : vector<128x128xbf16>, vector<128x128xbf16>, vector<128x128xf32> -> vector<128x128xf32>
    %c0_15 = arith.constant 0 : index
    %c0_16 = arith.constant 0 : index
    %20 = vector.load %arg7[%c0_15, %c0_16] : memref<1x128xf32, #tpu.memory_space<vmem>>, vector<1x128xf32>
    %21 = vector.broadcast %20 : vector<1x128xf32> to vector<128x128xf32>
    %22 = arith.addf %19, %21 : vector<128x128xf32>
    %cst_17 = arith.constant 0.000000e+00 : f32
    %23 = vector.broadcast %cst_17 : f32 to vector<128x128xf32>
    %24 = arith.maximumf %22, %23 : vector<128x128xf32>
    %25 = arith.truncf %24 : vector<128x128xf32> to vector<128x128xbf16>
    %c0_18 = arith.constant 0 : index
    %c0_19 = arith.constant 0 : index
    %26 = vector.load %arg8[%c0_18, %c0_19] : memref<128x2xbf16, #tpu.memory_space<vmem>>, vector<128x2xbf16>
    %cst_20 = arith.constant dense<0.000000e+00> : vector<128x2xf32>
    %27 = tpu.matmul %25, %26, %cst_20 {dimension_numbers = #tpu.dot_dimension_numbers<[1], [0], [0], [1], [0, 0, 1, 1], [], []>} : vector<128x128xbf16>, vector<128x2xbf16>, vector<128x2xf32> -> vector<128x2xf32>
    %c0_21 = arith.constant 0 : index
    %c0_22 = arith.constant 0 : index
    %28 = vector.load %arg9[%c0_21, %c0_22] : memref<1x2xf32, #tpu.memory_space<vmem>>, vector<1x2xf32>
    %29 = vector.broadcast %28 : vector<1x2xf32> to vector<128x2xf32>
    %30 = arith.addf %27, %29 : vector<128x2xf32>
    %cst_23 = arith.constant dense<0xFF800000> : vector<128xf32>
    %31 = vector.multi_reduction <maximumf>, %30, %cst_23 [1] : vector<128x2xf32> to vector<128xf32>
    %32 = vector.shape_cast %31 : vector<128xf32> to vector<128x1xf32>
    %33 = vector.broadcast %32 : vector<128x1xf32> to vector<128x2xf32>
    %34 = arith.subf %30, %33 : vector<128x2xf32>
    %35 = math.exp %34 : vector<128x2xf32>
    %cst_24 = arith.constant dense<0.000000e+00> : vector<128xf32>
    %36 = vector.multi_reduction <add>, %35, %cst_24 [1] : vector<128x2xf32> to vector<128xf32>
    %37 = vector.shape_cast %36 : vector<128xf32> to vector<128x1xf32>
    %38 = tpu.reciprocal %37 {approx = true} : vector<128x1xf32> -> vector<128x1xf32>
    %39 = vector.broadcast %38 : vector<128x1xf32> to vector<128x2xf32>
    %40 = arith.mulf %35, %39 : vector<128x2xf32>
    %c0_25 = arith.constant 0 : index
    %c0_26 = arith.constant 0 : index
    %41 = vector.load %arg10[%c0_25, %c0_26] : memref<128x2xf32, #tpu.memory_space<vmem>>, vector<128x2xf32>
    tpu.vector_store %arg10[%c0_25, %c0_26], %40 {strides = array<i32>} : memref<128x2xf32, #tpu.memory_space<vmem>>, vector<128x2xf32>,
    return
  }
  func.func @transform_0(%arg0: i32) -> (i32, i32) {
    %c0_i32 = arith.constant 0 : i32
    %c0_i32_0 = arith.constant 0 : i32
    return %arg0, %c0_i32 : i32, i32
  }
  func.func @transform_1(%arg0: i32) -> (i32, i32) {
    %c0_i32 = arith.constant 0 : i32
    %c0_i32_0 = arith.constant 0 : i32
    %c0_i32_1 = arith.constant 0 : i32
    return %c0_i32, %c0_i32_0 : i32, i32
  }
  func.func @transform_2(%arg0: i32) -> (i32, i32) {
    %c0_i32 = arith.constant 0 : i32
    %c0_i32_0 = arith.constant 0 : i32
    %c0_i32_1 = arith.constant 0 : i32
    return %c0_i32, %c0_i32_0 : i32, i32
  }
  func.func @transform_3(%arg0: i32) -> (i32, i32) {
    %c0_i32 = arith.constant 0 : i32
    %c0_i32_0 = arith.constant 0 : i32
    %c0_i32_1 = arith.constant 0 : i32
    return %c0_i32, %c0_i32_0 : i32, i32
  }
  func.func @transform_4(%arg0: i32) -> (i32, i32) {
    %c0_i32 = arith.constant 0 : i32
    %c0_i32_0 = arith.constant 0 : i32
    %c0_i32_1 = arith.constant 0 : i32
    return %c0_i32, %c0_i32_0 : i32, i32
  }
  func.func @transform_5(%arg0: i32) -> (i32, i32) {
    %c0_i32 = arith.constant 0 : i32
    %c0_i32_0 = arith.constant 0 : i32
    %c0_i32_1 = arith.constant 0 : i32
    return %c0_i32, %c0_i32_0 : i32, i32
  }
  func.func @transform_6(%arg0: i32) -> (i32, i32) {
    %c0_i32 = arith.constant 0 : i32
    %c0_i32_0 = arith.constant 0 : i32
    %c0_i32_1 = arith.constant 0 : i32
    return %c0_i32, %c0_i32_0 : i32, i32
  }
  func.func @transform_7(%arg0: i32) -> (i32, i32) {
    %c0_i32 = arith.constant 0 : i32
    %c0_i32_0 = arith.constant 0 : i32
    %c0_i32_1 = arith.constant 0 : i32
    return %c0_i32, %c0_i32_0 : i32, i32
  }
  func.func @transform_8(%arg0: i32) -> (i32, i32) {
    %c0_i32 = arith.constant 0 : i32
    %c0_i32_0 = arith.constant 0 : i32
    %c0_i32_1 = arith.constant 0 : i32
    return %c0_i32, %c0_i32_0 : i32, i32
  }
  func.func @transform_9(%arg0: i32) -> (i32, i32) {
    %c0_i32 = arith.constant 0 : i32
    %c0_i32_0 = arith.constant 0 : i32
    return %arg0, %c0_i32 : i32, i32
  }
}

</mosaic_0001>

<llo_original>
// kernel: mymodule8_forward.1
$region0: #{mymodule8_forward.1}
  #allocation0 [shape = 'u32[]', space=smem, size = 0x4, offset = 0x4, fixed_abs, tag = 'smem constant byte address 0x4 - core index']
  #allocation1 [shape = 'u32[144,128]{1,0:T(1,128)}', space=vmem, size = 0x12000, scoped, tag = 'internal scratch']
  %s0 = inlined_call_operand.vmem [shape: f32[256,9], index: 0, kind: input, shape index: {}]
  %s1 = inlined_call_operand.vmem [shape: bf16[9,128], index: 1, kind: input, shape index: {}]
  %s2 = inlined_call_operand.vmem [shape: f32[1,128], index: 2, kind: input, shape index: {}]
  %s3 = inlined_call_operand.vmem [shape: bf16[128,128], index: 3, kind: input, shape index: {}]
  %s4 = inlined_call_operand.vmem [shape: f32[1,128], index: 4, kind: input, shape index: {}]
  %s5 = inlined_call_operand.vmem [shape: bf16[128,128], index: 5, kind: input, shape index: {}]
  %s6 = inlined_call_operand.vmem [shape: f32[1,128], index: 6, kind: input, shape index: {}]
  %s7 = inlined_call_operand.vmem [shape: bf16[128,2], index: 7, kind: input, shape index: {}]
  %s8 = inlined_call_operand.vmem [shape: f32[1,2], index: 8, kind: input, shape index: {}]
  %s9 = inlined_call_operand.vmem [shape: f32[256,2], index: 9, kind: output, shape index: {}]
  %s10 = sld [smem:[#allocation0]]
  $region69: #{mymodule8_forward.1} parent=0
    _
  %s12 = ssub.s32 1, %s10
  %s13 = scalar_select 0, %s12, %s10
  loop: start=0, step=1, limit=4
  $region2: #{mymodule8_forward.1} parent=0 // loop_pre_header
    _
  $region3: #{mymodule8_forward.1} parent=0 // loop_header
    %s15 = sphi 0, %s19
    %p16 = scmp.ge.s32.totalorder %s15, 4
    %s25 = sphi 0, %s27
    %s28 = sphi 0, %s25
    %s29 = sphi 0, %s28
    %s45 = sphi 0, %s29
    %s49 = sphi 0, %s49
    %s51 = sphi 0, %s49
    %s52 = sphi 0, %s51
    %s66 = sphi 0, %s52
    %s70 = sphi 0, %s70
    %s72 = sphi 0, %s70
    %s73 = sphi 0, %s72
    %s87 = sphi 0, %s73
    %s91 = sphi 0, %s91
    %s93 = sphi 0, %s91
    %s94 = sphi 0, %s93
    %s108 = sphi 0, %s94
    %s112 = sphi 0, %s112
    %s114 = sphi 0, %s112
    %s115 = sphi 0, %s114
    %s129 = sphi 0, %s115
    %s133 = sphi 0, %s133
    %s135 = sphi 0, %s133
    %s136 = sphi 0, %s135
    %s150 = sphi 0, %s136
    %s154 = sphi 0, %s154
    %s156 = sphi 0, %s154
    %s157 = sphi 0, %s156
    %s171 = sphi 0, %s157
    %s175 = sphi 0, %s175
    %s177 = sphi 0, %s175
    %s178 = sphi 0, %s177
    %s192 = sphi 0, %s178
    %s196 = sphi 0, %s196
    %s198 = sphi 0, %s196
    %s199 = sphi 0, %s198
    %s213 = sphi 0, %s199
    %s219 = sphi 0, %s221
    %s222 = sphi 0, %s219
    %s223 = sphi 0, %s222
    %s239 = sphi 0, %s223
  $region4: #{mymodule8_forward.1} parent=0 // loop_header_branch
    %18 = sbr.rel (%p16) target = $region8
  $region5: #{mymodule8_forward.1} parent=0 // loop_body
    %s20 = ssub.s32 %s15, 1
    %s21 = ssub.s32 %s15, 2
    %s22 = sadd.s32 %s15, 1
    %s23 = ssub.s32 %s15, %s22
    %p24 = scmp.eq.s32.totalorder %s23, 0
    %s26 = sadd.s32 %s25, 1
    %s27 = scalar_select %p24, %s25, %s26
    %p30 = pneg %p24
    %p31 = scmp.eq.s32.totalorder %s15, 1
    %p32 = por %p30, %p31
    %p33 = scmp.ne.s32.totalorder %s25, %s28
    %p34 = scmp.eq.s32.totalorder %s15, 0
    %p35 = por %p33, %p34
    %p36 = scmp.ne.s32.totalorder %s25, %s28
    %p37 = scmp.eq.s32.totalorder %s20, 1
    %p38 = por %p36, %p37
    %p39 = scmp.ne.s32.totalorder %s28, %s29
    %p40 = scmp.eq.s32.totalorder %s20, 0
    %p41 = por %p39, %p40
    %p42 = scmp.ne.s32.totalorder %s28, %s29
    %p43 = scmp.eq.s32.totalorder %s21, 1
    %p44 = por %p42, %p43
    %p46 = scmp.ne.s32.totalorder %s29, %s45
    %p47 = scmp.eq.s32.totalorder %s21, 0
    %p48 = por %p46, %p47
    %s50 = sadd.s32 %s49, 1
    %p53 = scmp.eq.s32.totalorder %s15, 1
    %p54 = scmp.ne.s32.totalorder %s49, %s51
    %p55 = scmp.eq.s32.totalorder %s15, 0
    %p56 = por %p54, %p55
    %p57 = scmp.ne.s32.totalorder %s49, %s51
    %p58 = scmp.eq.s32.totalorder %s20, 1
    %p59 = por %p57, %p58
    %p60 = scmp.ne.s32.totalorder %s51, %s52
    %p61 = scmp.eq.s32.totalorder %s20, 0
    %p62 = por %p60, %p61
    %p63 = scmp.ne.s32.totalorder %s51, %s52
    %p64 = scmp.eq.s32.totalorder %s21, 1
    %p65 = por %p63, %p64
    %p67 = scmp.ne.s32.totalorder %s52, %s66
    %p68 = scmp.eq.s32.totalorder %s21, 0
    %p69 = por %p67, %p68
    %s71 = sadd.s32 %s70, 1
    %p74 = scmp.eq.s32.totalorder %s15, 1
    %p75 = scmp.ne.s32.totalorder %s70, %s72
    %p76 = scmp.eq.s32.totalorder %s15, 0
    %p77 = por %p75, %p76
    %p78 = scmp.ne.s32.totalorder %s70, %s72
    %p79 = scmp.eq.s32.totalorder %s20, 1
    %p80 = por %p78, %p79
    %p81 = scmp.ne.s32.totalorder %s72, %s73
    %p82 = scmp.eq.s32.totalorder %s20, 0
    %p83 = por %p81, %p82
    %p84 = scmp.ne.s32.totalorder %s72, %s73
    %p85 = scmp.eq.s32.totalorder %s21, 1
    %p86 = por %p84, %p85
    %p88 = scmp.ne.s32.totalorder %s73, %s87
    %p89 = scmp.eq.s32.totalorder %s21, 0
    %p90 = por %p88, %p89
    %s92 = sadd.s32 %s91, 1
    %p95 = scmp.eq.s32.totalorder %s15, 1
    %p96 = scmp.ne.s32.totalorder %s91, %s93
    %p97 = scmp.eq.s32.totalorder %s15, 0
    %p98 = por %p96, %p97
    %p99 = scmp.ne.s32.totalorder %s91, %s93
    %p100 = scmp.eq.s32.totalorder %s20, 1
    %p101 = por %p99, %p100
    %p102 = scmp.ne.s32.totalorder %s93, %s94
    %p103 = scmp.eq.s32.totalorder %s20, 0
    %p104 = por %p102, %p103
    %p105 = scmp.ne.s32.totalorder %s93, %s94
    %p106 = scmp.eq.s32.totalorder %s21, 1
    %p107 = por %p105, %p106
    %p109 = scmp.ne.s32.totalorder %s94, %s108
    %p110 = scmp.eq.s32.totalorder %s21, 0
    %p111 = por %p109, %p110
    %s113 = sadd.s32 %s112, 1
    %p116 = scmp.eq.s32.totalorder %s15, 1
    %p117 = scmp.ne.s32.totalorder %s112, %s114
    %p118 = scmp.eq.s32.totalorder %s15, 0
    %p119 = por %p117, %p118
    %p120 = scmp.ne.s32.totalorder %s112, %s114
    %p121 = scmp.eq.s32.totalorder %s20, 1
    %p122 = por %p120, %p121
    %p123 = scmp.ne.s32.totalorder %s114, %s115
    %p124 = scmp.eq.s32.totalorder %s20, 0
    %p125 = por %p123, %p124
    %p126 = scmp.ne.s32.totalorder %s114, %s115
    %p127 = scmp.eq.s32.totalorder %s21, 1
    %p128 = por %p126, %p127
    %p130 = scmp.ne.s32.totalorder %s115, %s129
    %p131 = scmp.eq.s32.totalorder %s21, 0
    %p132 = por %p130, %p131
    %s134 = sadd.s32 %s133, 1
    %p137 = scmp.eq.s32.totalorder %s15, 1
    %p138 = scmp.ne.s32.totalorder %s133, %s135
    %p139 = scmp.eq.s32.totalorder %s15, 0
    %p140 = por %p138, %p139
    %p141 = scmp.ne.s32.totalorder %s133, %s135
    %p142 = scmp.eq.s32.totalorder %s20, 1
    %p143 = por %p141, %p142
    %p144 = scmp.ne.s32.totalorder %s135, %s136
    %p145 = scmp.eq.s32.totalorder %s20, 0
    %p146 = por %p144, %p145
    %p147 = scmp.ne.s32.totalorder %s135, %s136
    %p148 = scmp.eq.s32.totalorder %s21, 1
    %p149 = por %p147, %p148
    %p151 = scmp.ne.s32.totalorder %s136, %s150
    %p152 = scmp.eq.s32.totalorder %s21, 0
    %p153 = por %p151, %p152
    %s155 = sadd.s32 %s154, 1
    %p158 = scmp.eq.s32.totalorder %s15, 1
    %p159 = scmp.ne.s32.totalorder %s154, %s156
    %p160 = scmp.eq.s32.totalorder %s15, 0
    %p161 = por %p159, %p160
    %p162 = scmp.ne.s32.totalorder %s154, %s156
    %p163 = scmp.eq.s32.totalorder %s20, 1
    %p164 = por %p162, %p163
    %p165 = scmp.ne.s32.totalorder %s156, %s157
    %p166 = scmp.eq.s32.totalorder %s20, 0
    %p167 = por %p165, %p166
    %p168 = scmp.ne.s32.totalorder %s156, %s157
    %p169 = scmp.eq.s32.totalorder %s21, 1
    %p170 = por %p168, %p169
    %p172 = scmp.ne.s32.totalorder %s157, %s171
    %p173 = scmp.eq.s32.totalorder %s21, 0
    %p174 = por %p172, %p173
    %s176 = sadd.s32 %s175, 1
    %p179 = scmp.eq.s32.totalorder %s15, 1
    %p180 = scmp.ne.s32.totalorder %s175, %s177
    %p181 = scmp.eq.s32.totalorder %s15, 0
    %p182 = por %p180, %p181
    %p183 = scmp.ne.s32.totalorder %s175, %s177
    %p184 = scmp.eq.s32.totalorder %s20, 1
    %p185 = por %p183, %p184
    %p186 = scmp.ne.s32.totalorder %s177, %s178
    %p187 = scmp.eq.s32.totalorder %s20, 0
    %p188 = por %p186, %p187
    %p189 = scmp.ne.s32.totalorder %s177, %s178
    %p190 = scmp.eq.s32.totalorder %s21, 1
    %p191 = por %p189, %p190
    %p193 = scmp.ne.s32.totalorder %s178, %s192
    %p194 = scmp.eq.s32.totalorder %s21, 0
    %p195 = por %p193, %p194
    %s197 = sadd.s32 %s196, 1
    %p200 = scmp.eq.s32.totalorder %s15, 1
    %p201 = scmp.ne.s32.totalorder %s196, %s198
    %p202 = scmp.eq.s32.totalorder %s15, 0
    %p203 = por %p201, %p202
    %p204 = scmp.ne.s32.totalorder %s196, %s198
    %p205 = scmp.eq.s32.totalorder %s20, 1
    %p206 = por %p204, %p205
    %p207 = scmp.ne.s32.totalorder %s198, %s199
    %p208 = scmp.eq.s32.totalorder %s20, 0
    %p209 = por %p207, %p208
    %p210 = scmp.ne.s32.totalorder %s198, %s199
    %p211 = scmp.eq.s32.totalorder %s21, 1
    %p212 = por %p210, %p211
    %p214 = scmp.ne.s32.totalorder %s199, %s213
    %p215 = scmp.eq.s32.totalorder %s21, 0
    %p216 = por %p214, %p215
    %s217 = ssub.s32 %s15, %s22
    %p218 = scmp.eq.s32.totalorder %s217, 0
    %s220 = sadd.s32 %s219, 1
    %s221 = scalar_select %p218, %s219, %s220
    %p224 = pneg %p218
    %p225 = scmp.eq.s32.totalorder %s15, 1
    %p226 = por %p224, %p225
    %p227 = scmp.ne.s32.totalorder %s219, %s222
    %p228 = scmp.eq.s32.totalorder %s15, 0
    %p229 = por %p227, %p228
    %p230 = scmp.ne.s32.totalorder %s219, %s222
    %p231 = scmp.eq.s32.totalorder %s20, 1
    %p232 = por %p230, %p231
    %p233 = scmp.ne.s32.totalorder %s222, %s223
    %p234 = scmp.eq.s32.totalorder %s20, 0
    %p235 = por %p233, %p234
    %p236 = scmp.ne.s32.totalorder %s222, %s223
    %p237 = scmp.eq.s32.totalorder %s21, 1
    %p238 = por %p236, %p237
    %p240 = scmp.ne.s32.totalorder %s223, %s239
    %p241 = scmp.eq.s32.totalorder %s21, 0
    %p242 = por %p240, %p241
    %p243 = scmp.le.s32.totalorder 1, %s15
    %p244 = scmp.lt.s32.totalorder %s15, 3
    %p245 = pnand %p243, %p244
    %p246 = pneg %p245
    // Predicated region
    $region9: #{mymodule8_forward.1} parent=5 // pred_check
      _
    $region10: #{mymodule8_forward.1} parent=5 // pred_check_branch
      %248 = sbr.rel (%p245) target = $region12
    $region11: #{mymodule8_forward.1} parent=5 // pred_region
      %s249 = ssub.s32 %s15, 1
      // Predicated region
      $region13: #{mymodule8_forward.1} parent=11 // pred_check
        %p250 = pneg %p62
      $region14: #{mymodule8_forward.1} parent=11 // pred_check_branch
        %252 = sbr.rel (%p250) target = $region16
      $region15: #{mymodule8_forward.1} parent=11 // pred_region
        _
      $region16: #{mymodule8_forward.1} parent=11 // pred_fallthru
        _
      // Predicated region
      $region17: #{mymodule8_forward.1} parent=11 // pred_check
        %p253 = pneg %p83
      $region18: #{mymodule8_forward.1} parent=11 // pred_check_branch
        %255 = sbr.rel (%p253) target = $region20
      $region19: #{mymodule8_forward.1} parent=11 // pred_region
        _
      $region20: #{mymodule8_forward.1} parent=11 // pred_fallthru
        _
      // Predicated region
      $region21: #{mymodule8_forward.1} parent=11 // pred_check
        %p256 = pneg %p104
      $region22: #{mymodule8_forward.1} parent=11 // pred_check_branch
        %258 = sbr.rel (%p256) target = $region24
      $region23: #{mymodule8_forward.1} parent=11 // pred_region
        _
      $region24: #{mymodule8_forward.1} parent=11 // pred_fallthru
        _
      // Predicated region
      $region25: #{mymodule8_forward.1} parent=11 // pred_check
        %p259 = pneg %p125
      $region26: #{mymodule8_forward.1} parent=11 // pred_check_branch
        %261 = sbr.rel (%p259) target = $region28
      $region27: #{mymodule8_forward.1} parent=11 // pred_region
        _
      $region28: #{mymodule8_forward.1} parent=11 // pred_fallthru
        _
      // Predicated region
      $region29: #{mymodule8_forward.1} parent=11 // pred_check
        %p262 = pneg %p146
      $region30: #{mymodule8_forward.1} parent=11 // pred_check_branch
        %264 = sbr.rel (%p262) target = $region32
      $region31: #{mymodule8_forward.1} parent=11 // pred_region
        _
      $region32: #{mymodule8_forward.1} parent=11 // pred_fallthru
        _
      // Predicated region
      $region33: #{mymodule8_forward.1} parent=11 // pred_check
        %p265 = pneg %p167
      $region34: #{mymodule8_forward.1} parent=11 // pred_check_branch
        %267 = sbr.rel (%p265) target = $region36
      $region35: #{mymodule8_forward.1} parent=11 // pred_region
        _
      $region36: #{mymodule8_forward.1} parent=11 // pred_fallthru
        _
      // Predicated region
      $region37: #{mymodule8_forward.1} parent=11 // pred_check
        %p268 = pneg %p188
      $region38: #{mymodule8_forward.1} parent=11 // pred_check_branch
        %270 = sbr.rel (%p268) target = $region40
      $region39: #{mymodule8_forward.1} parent=11 // pred_region
        _
      $region40: #{mymodule8_forward.1} parent=11 // pred_fallthru
        _
      // Predicated region
      $region41: #{mymodule8_forward.1} parent=11 // pred_check
        %p271 = pneg %p209
      $region42: #{mymodule8_forward.1} parent=11 // pred_check_branch
        %273 = sbr.rel (%p271) target = $region44
      $region43: #{mymodule8_forward.1} parent=11 // pred_region
        _
      $region44: #{mymodule8_forward.1} parent=11 // pred_fallthru
        _
    $region12: #{mymodule8_forward.1} parent=5 // pred_fallthru
      _
    %p274 = scmp.lt.s32.totalorder %s15, 2
    // Predicated region
    $region45: #{mymodule8_forward.1} parent=5 // pred_check
      %p275 = pneg %p274
    $region46: #{mymodule8_forward.1} parent=5 // pred_check_branch
      %277 = sbr.rel (%p275) target = $region48
    $region47: #{mymodule8_forward.1} parent=5 // pred_region
      // Predicated region
      $region49: #{mymodule8_forward.1} parent=47 // pred_check
        %p278 = pneg %p35
      $region50: #{mymodule8_forward.1} parent=47 // pred_check_branch
        %280 = sbr.rel (%p278) target = $region52
      $region51: #{mymodule8_forward.1} parent=47 // pred_region
        %s281 = smul.u32 16, %s15
        %p282 = scmp.lt.s32.totalorder %s281, 31
        %s283 = scalar_select %p282, %s281, 31
        %s284 = smul.addr %s283, 8
        %s285 = scalar_lea.vmem %s0, %s284
        %s286 = smul.u32 16, %s15
      $region52: #{mymodule8_forward.1} parent=47 // pred_fallthru
        _
    $region48: #{mymodule8_forward.1} parent=5 // pred_fallthru
      _
    %p287 = scmp.le.s32.totalorder 1, %s15
    %p288 = scmp.lt.s32.totalorder %s15, 3
    %p289 = pnand %p287, %p288
    %p290 = pneg %p289
    // Predicated region
    $region53: #{mymodule8_forward.1} parent=5 // pred_check
      _
    $region54: #{mymodule8_forward.1} parent=5 // pred_check_branch
      %292 = sbr.rel (%p289) target = $region56
    $region55: #{mymodule8_forward.1} parent=5 // pred_region
      %s293 = ssub.s32 %s15, 1
      %s294 = smul.u32 16, %s20
      %p295 = scmp.lt.s32.totalorder %s294, 31
      %s296 = scalar_select %p295, %s294, 31
      %s297 = smul.addr %s296, 8
      %s298 = scalar_lea.vmem %s0, %s297
      %p299 = pneg %p41
      %p300 = pneg %p38
      %p301 = pneg %p62
      %p302 = pneg %p59
      %p303 = pneg %p83
      %p304 = pneg %p80
      %p305 = pneg %p104
      %p306 = pneg %p101
      %p307 = pneg %p125
      %p308 = pneg %p122
      %p309 = pneg %p146
      %p310 = pneg %p143
      %p311 = pneg %p167
      %p312 = pneg %p164
      %p313 = pneg %p188
      %p314 = pneg %p185
      %p315 = pneg %p209
      %p316 = pneg %p206
      %p317 = pneg %p235
      %p318 = pneg %p232
      %s319 = smul.u32 16, %s20
      %p320 = scmp.lt.s32.totalorder %s319, 31
      %s321 = scalar_select %p320, %s319, 31
      %s322 = smul.addr %s321, 8
      %s323 = scalar_lea.vmem %s9, %s322
      %s324 = smul.u32 16, %s20
      %p325 = scmp.lt.s32.totalorder %s324, 31
      %s326 = scalar_select %p325, %s324, 31
      %s327 = smul.addr %s326, 8
      %s328 = scalar_lea.vmem %s0, %s327
      %s329 = smul.u32 16, %s20
      %s330 = smul.u32 16, %s20
      %p331 = scmp.lt.s32.totalorder %s330, 31
      %s332 = scalar_select %p331, %s330, 31
      %s333 = smul.addr %s332, 8
      %s334 = scalar_lea.vmem %s9, %s333
      %s335 = smul.u32 16, %s20
      %v337 = vld [vmem:[%s328] sm:$0xff]
      %v338 = vld [vmem:[%s328 + $0x8] sm:$0xff]
      %v339 = vld [vmem:[%s328 + $0x10] sm:$0xff]
      %v340 = vld [vmem:[%s328 + $0x18] sm:$0xff]
      %v341 = vld [vmem:[%s328 + $0x20] sm:$0xff]
      %v342 = vld [vmem:[%s328 + $0x28] sm:$0xff]
      %v343 = vld [vmem:[%s328 + $0x30] sm:$0xff]
      %v344 = vld [vmem:[%s328 + $0x38] sm:$0xff]
      %v345 = vld [vmem:[%s328 + $0x40] sm:$0xff]
      %v346 = vld [vmem:[%s328 + $0x48] sm:$0xff]
      %v347 = vld [vmem:[%s328 + $0x50] sm:$0xff]
      %v348 = vld [vmem:[%s328 + $0x58] sm:$0xff]
      %v349 = vld [vmem:[%s328 + $0x60] sm:$0xff]
      %v350 = vld [vmem:[%s328 + $0x68] sm:$0xff]
      %v351 = vld [vmem:[%s328 + $0x70] sm:$0xff]
      %v352 = vld [vmem:[%s328 + $0x78] sm:$0xff]
      %v353 = vpack.c.bf16 %v338, %v337
      %v354 = vpack.c.bf16 %v340, %v339
      %v355 = vpack.c.bf16 %v342, %v341
      %v356 = vpack.c.bf16 %v344, %v343
      %v357 = vpack.c.bf16 %v346, %v345
      %v358 = vpack.c.bf16 %v348, %v347
      %v359 = vpack.c.bf16 %v350, %v349
      %v360 = vpack.c.bf16 %v352, %v351
      %v361 = vld [vmem:[%s1] sm:$0xf]
      %v362 = vld [vmem:[%s1 + $0x4] sm:$0x1]
      %v363 = vld [vmem:[%s2] sm:$0x1]
      %v365 = vlaneseq
      %v366 = vshrl.u32 %v365, 7
      %v367 = vsub.s32 0, %v366
      %v368 = vrot.slane %v363, %v367
      %v372 = vunpack.c.l.b16 %v361
      %v373 = vunpack.c.l.b16 %v362
      %v374 = vpack.c.b16 %v373, %v372
      %vm375 = vcmask 72704
      %v377 = vsel %vm375, %v353, 0
      %v380 = vsel %vm375, %v354, 0
      %v383 = vsel %vm375, %v355, 0
      %v386 = vsel %vm375, %v356, 0
      %v389 = vsel %vm375, %v357, 0
      %v392 = vsel %vm375, %v358, 0
      %v395 = vsel %vm375, %v359, 0
      %v398 = vsel %vm375, %v360, 0
      %vm400 = vcmask 1043456
      %vm401 = vcmask 1044480
      %v402 = vsel %vm400, 4294967295, 65535
      %v403 = vsel %vm401, %v402, 0
      %v405 = vand.u32 %v374, %v403
      %407 = vmatprep.subr.bf16.mxu0 0
      %408 = vmatpush1.bf16.msra.mxu0 %v405
      %409 = vmatprep.subr.bf16.mxu0 0
      %410 = vmatpush1.bf16.msra.mxu0 0
      %411 = vmatprep.subr.bf16.mxu0 0
      %412 = vmatpush1.bf16.msra.mxu0 0
      %413 = vmatprep.subr.bf16.mxu0 0
      %414 = vmatpush1.bf16.msra.mxu0 0
      %415 = vmatprep.subr.bf16.mxu0 0
      %416 = vmatpush1.bf16.msra.mxu0 0
      %417 = vmatprep.subr.bf16.mxu0 0
      %418 = vmatpush1.bf16.msra.mxu0 0
      %419 = vmatprep.subr.bf16.mxu0 0
      %420 = vmatpush1.bf16.msra.mxu0 0
      %421 = vmatprep.subr.bf16.mxu0 0
      %422 = vmatpush1.bf16.msra.mxu0 0
      %423 = vmatprep.subr.bf16.mxu0 0
      %424 = vmatpush1.bf16.msra.mxu0 0
      %425 = vmatprep.subr.bf16.mxu0 0
      %426 = vmatpush1.bf16.msra.mxu0 0
      %427 = vmatprep.subr.bf16.mxu0 0
      %428 = vmatpush1.bf16.msra.mxu0 0
      %429 = vmatprep.subr.bf16.mxu0 0
      %430 = vmatpush1.bf16.msra.mxu0 0
      %431 = vmatprep.subr.bf16.mxu0 0
      %432 = vmatpush1.bf16.msra.mxu0 0
      %433 = vmatprep.subr.bf16.mxu0 0
      %434 = vmatpush1.bf16.msra.mxu0 0
      %435 = vmatprep.subr.bf16.mxu0 0
      %436 = vmatpush1.bf16.msra.mxu0 0
      %437 = vmatprep.subr.bf16.mxu0 0
      %438 = vmatpush1.bf16.msra.mxu0 0
      %439 = vmatprep.mubr.bf16.mxu0 0
      %440 = vmatmul.mubr.bf16.gmra.mrb[0].mxu0 %v377
      %v441 = vpop.f32.mrb[0].mxu0
      %v442 = vadd.f32 %v368, %v441
      %v443 = vpop.f32.mrb[0].mxu0
      %v444 = vpop.f32.mrb[0].mxu0
      %v445 = vadd.f32 %v368, %v444
      %v446 = vpop.f32.mrb[0].mxu0
      %447 = vmatprep.mubr.bf16.mxu0 0
      %448 = vmatmul.mubr.bf16.gmra.mrb[0].mxu0 %v380
      %v449 = vpop.f32.mrb[0].mxu0
      %v450 = vadd.f32 %v368, %v449
      %v451 = vpop.f32.mrb[0].mxu0
      %v452 = vpop.f32.mrb[0].mxu0
      %v453 = vadd.f32 %v368, %v452
      %v454 = vpop.f32.mrb[0].mxu0
      %455 = vmatprep.mubr.bf16.mxu0 0
      %456 = vmatmul.mubr.bf16.gmra.mrb[0].mxu0 %v383
      %v457 = vpop.f32.mrb[0].mxu0
      %v458 = vadd.f32 %v368, %v457
      %v459 = vpop.f32.mrb[0].mxu0
      %v460 = vpop.f32.mrb[0].mxu0
      %v461 = vadd.f32 %v368, %v460
      %v462 = vpop.f32.mrb[0].mxu0
      %463 = vmatprep.mubr.bf16.mxu0 0
      %464 = vmatmul.mubr.bf16.gmra.mrb[0].mxu0 %v386
      %v465 = vpop.f32.mrb[0].mxu0
      %v466 = vadd.f32 %v368, %v465
      %v467 = vpop.f32.mrb[0].mxu0
      %v468 = vpop.f32.mrb[0].mxu0
      %v469 = vadd.f32 %v368, %v468
      %v470 = vpop.f32.mrb[0].mxu0
      %471 = vmatprep.mubr.bf16.mxu0 0
      %472 = vmatmul.mubr.bf16.gmra.mrb[0].mxu0 %v389
      %v473 = vpop.f32.mrb[0].mxu0
      %v474 = vadd.f32 %v368, %v473
      %v475 = vpop.f32.mrb[0].mxu0
      %v476 = vpop.f32.mrb[0].mxu0
      %v477 = vadd.f32 %v368, %v476
      %v478 = vpop.f32.mrb[0].mxu0
      %479 = vmatprep.mubr.bf16.mxu0 0
      %480 = vmatmul.mubr.bf16.gmra.mrb[0].mxu0 %v392
      %v481 = vpop.f32.mrb[0].mxu0
      %v482 = vadd.f32 %v368, %v481
      %v483 = vpop.f32.mrb[0].mxu0
      %v484 = vpop.f32.mrb[0].mxu0
      %v485 = vadd.f32 %v368, %v484
      %v486 = vpop.f32.mrb[0].mxu0
      %487 = vmatprep.mubr.bf16.mxu0 0
      %488 = vmatmul.mubr.bf16.gmra.mrb[0].mxu0 %v395
      %v489 = vpop.f32.mrb[0].mxu0
      %v490 = vadd.f32 %v368, %v489
      %v491 = vpop.f32.mrb[0].mxu0
      %v492 = vpop.f32.mrb[0].mxu0
      %v493 = vadd.f32 %v368, %v492
      %v494 = vpop.f32.mrb[0].mxu0
      %495 = vmatprep.mubr.bf16.mxu0 0
      %496 = vmatmul.mubr.bf16.gmra.mrb[0].mxu0 %v398
      %v497 = vpop.f32.mrb[0].mxu0
      %v498 = vadd.f32 %v368, %v497
      %v499 = vpop.f32.mrb[0].mxu0
      %v500 = vpop.f32.mrb[0].mxu0
      %v501 = vadd.f32 %v368, %v500
      %v502 = vpop.f32.mrb[0].mxu0
      %503 = vdwg.mxu0
      %v504 = vmax.f32 %v442, 0.0
      %v505 = vmax.f32 %v445, 0.0
      %v506 = vmax.f32 %v450, 0.0
      %v507 = vmax.f32 %v453, 0.0
      %v508 = vmax.f32 %v458, 0.0
      %v509 = vmax.f32 %v461, 0.0
      %v510 = vmax.f32 %v466, 0.0
      %v511 = vmax.f32 %v469, 0.0
      %v512 = vmax.f32 %v474, 0.0
      %v513 = vmax.f32 %v477, 0.0
      %v514 = vmax.f32 %v482, 0.0
      %v515 = vmax.f32 %v485, 0.0
      %v516 = vmax.f32 %v490, 0.0
      %v517 = vmax.f32 %v493, 0.0
      %v518 = vmax.f32 %v498, 0.0
      %v519 = vmax.f32 %v501, 0.0
      %v520 = vpack.c.bf16 %v505, %v504
      %v521 = vpack.c.bf16 %v507, %v506
      %v522 = vpack.c.bf16 %v509, %v508
      %v523 = vpack.c.bf16 %v511, %v510
      %v524 = vpack.c.bf16 %v513, %v512
      %v525 = vpack.c.bf16 %v515, %v514
      %v526 = vpack.c.bf16 %v517, %v516
      %v527 = vpack.c.bf16 %v519, %v518
      %v528 = vld [vmem:[%s3] sm:$0xf]
      %v529 = vld [vmem:[%s3 + $0x4] sm:$0xf]
      %v530 = vld [vmem:[%s3 + $0x8] sm:$0xf]
      %v531 = vld [vmem:[%s3 + $0xc] sm:$0xf]
      %v532 = vld [vmem:[%s3 + $0x10] sm:$0xf]
      %v533 = vld [vmem:[%s3 + $0x14] sm:$0xf]
      %v534 = vld [vmem:[%s3 + $0x18] sm:$0xf]
      %v535 = vld [vmem:[%s3 + $0x1c] sm:$0xf]
      %v536 = vld [vmem:[%s3 + $0x20] sm:$0xf]
      %v537 = vld [vmem:[%s3 + $0x24] sm:$0xf]
      %v538 = vld [vmem:[%s3 + $0x28] sm:$0xf]
      %v539 = vld [vmem:[%s3 + $0x2c] sm:$0xf]
      %v540 = vld [vmem:[%s3 + $0x30] sm:$0xf]
      %v541 = vld [vmem:[%s3 + $0x34] sm:$0xf]
      %v542 = vld [vmem:[%s3 + $0x38] sm:$0xf]
      %v543 = vld [vmem:[%s3 + $0x3c] sm:$0xf]
      %v544 = vld [vmem:[%s4] sm:$0x1]
      %v546 = vlaneseq
      %v547 = vshrl.u32 %v546, 7
      %v548 = vsub.s32 0, %v547
      %v549 = vrot.slane %v544, %v548
      %v567 = vunpack.c.l.b16 %v528
      %v568 = vunpack.c.l.b16 %v529
      %v569 = vunpack.c.l.b16 %v530
      %v570 = vunpack.c.l.b16 %v531
      %v571 = vunpack.c.l.b16 %v532
      %v572 = vunpack.c.l.b16 %v533
      %v573 = vunpack.c.l.b16 %v534
      %v574 = vunpack.c.l.b16 %v535
      %v575 = vunpack.c.l.b16 %v536
      %v576 = vunpack.c.l.b16 %v537
      %v577 = vunpack.c.l.b16 %v538
      %v578 = vunpack.c.l.b16 %v539
      %v579 = vunpack.c.l.b16 %v540
      %v580 = vunpack.c.l.b16 %v541
      %v581 = vunpack.c.l.b16 %v542
      %v582 = vunpack.c.l.b16 %v543
      %v583 = vpack.c.b16 %v568, %v567
      %v584 = vpack.c.b16 %v570, %v569
      %v585 = vpack.c.b16 %v572, %v571
      %v586 = vpack.c.b16 %v574, %v573
      %v587 = vpack.c.b16 %v576, %v575
      %v588 = vpack.c.b16 %v578, %v577
      %v589 = vpack.c.b16 %v580, %v579
      %v590 = vpack.c.b16 %v582, %v581
      %599 = vmatprep.subr.bf16.mxu0 0
      %600 = vmatpush1.bf16.msra.mxu0 %v583
      %601 = vmatprep.subr.bf16.mxu0 0
      %602 = vmatpush1.bf16.msra.mxu0 %v584
      %603 = vmatprep.subr.bf16.mxu0 0
      %604 = vmatpush1.bf16.msra.mxu0 %v585
      %605 = vmatprep.subr.bf16.mxu0 0
      %606 = vmatpush1.bf16.msra.mxu0 %v586
      %607 = vmatprep.subr.bf16.mxu0 0
      %608 = vmatpush1.bf16.msra.mxu0 %v587
      %609 = vmatprep.subr.bf16.mxu0 0
      %610 = vmatpush1.bf16.msra.mxu0 %v588
      %611 = vmatprep.subr.bf16.mxu0 0
      %612 = vmatpush1.bf16.msra.mxu0 %v589
      %613 = vmatprep.subr.bf16.mxu0 0
      %614 = vmatpush1.bf16.msra.mxu0 %v590
      %615 = vmatprep.subr.bf16.mxu0 0
      %616 = vmatpush1.bf16.msra.mxu0 0
      %617 = vmatprep.subr.bf16.mxu0 0
      %618 = vmatpush1.bf16.msra.mxu0 0
      %619 = vmatprep.subr.bf16.mxu0 0
      %620 = vmatpush1.bf16.msra.mxu0 0
      %621 = vmatprep.subr.bf16.mxu0 0
      %622 = vmatpush1.bf16.msra.mxu0 0
      %623 = vmatprep.subr.bf16.mxu0 0
      %624 = vmatpush1.bf16.msra.mxu0 0
      %625 = vmatprep.subr.bf16.mxu0 0
      %626 = vmatpush1.bf16.msra.mxu0 0
      %627 = vmatprep.subr.bf16.mxu0 0
      %628 = vmatpush1.bf16.msra.mxu0 0
      %629 = vmatprep.subr.bf16.mxu0 0
      %630 = vmatpush1.bf16.msra.mxu0 0
      %631 = vmatprep.mubr.bf16.mxu0 0
      %632 = vmatmul.mubr.bf16.gmra.mrb[0].mxu0 %v520
      %v633 = vpop.f32.mrb[0].mxu0
      %v634 = vadd.f32 %v549, %v633
      %v635 = vpop.f32.mrb[0].mxu0
      %v636 = vpop.f32.mrb[0].mxu0
      %v637 = vadd.f32 %v549, %v636
      %v638 = vpop.f32.mrb[0].mxu0
      %639 = vmatprep.mubr.bf16.mxu0 0
      %640 = vmatmul.mubr.bf16.gmra.mrb[0].mxu0 %v521
      %v641 = vpop.f32.mrb[0].mxu0
      %v642 = vadd.f32 %v549, %v641
      %v643 = vpop.f32.mrb[0].mxu0
      %v644 = vpop.f32.mrb[0].mxu0
      %v645 = vadd.f32 %v549, %v644
      %v646 = vpop.f32.mrb[0].mxu0
      %647 = vmatprep.mubr.bf16.mxu0 0
      %648 = vmatmul.mubr.bf16.gmra.mrb[0].mxu0 %v522
      %v649 = vpop.f32.mrb[0].mxu0
      %v650 = vadd.f32 %v549, %v649
      %v651 = vpop.f32.mrb[0].mxu0
      %v652 = vpop.f32.mrb[0].mxu0
      %v653 = vadd.f32 %v549, %v652
      %v654 = vpop.f32.mrb[0].mxu0
      %655 = vmatprep.mubr.bf16.mxu0 0
      %656 = vmatmul.mubr.bf16.gmra.mrb[0].mxu0 %v523
      %v657 = vpop.f32.mrb[0].mxu0
      %v658 = vadd.f32 %v549, %v657
      %v659 = vpop.f32.mrb[0].mxu0
      %v660 = vpop.f32.mrb[0].mxu0
      %v661 = vadd.f32 %v549, %v660
      %v662 = vpop.f32.mrb[0].mxu0
      %663 = vmatprep.mubr.bf16.mxu0 0
      %664 = vmatmul.mubr.bf16.gmra.mrb[0].mxu0 %v524
      %v665 = vpop.f32.mrb[0].mxu0
      %v666 = vadd.f32 %v549, %v665
      %v667 = vpop.f32.mrb[0].mxu0
      %v668 = vpop.f32.mrb[0].mxu0
      %v669 = vadd.f32 %v549, %v668
      %v670 = vpop.f32.mrb[0].mxu0
      %671 = vmatprep.mubr.bf16.mxu0 0
      %672 = vmatmul.mubr.bf16.gmra.mrb[0].mxu0 %v525
      %v673 = vpop.f32.mrb[0].mxu0
      %v674 = vadd.f32 %v549, %v673
      %v675 = vpop.f32.mrb[0].mxu0
      %v676 = vpop.f32.mrb[0].mxu0
      %v677 = vadd.f32 %v549, %v676
      %v678 = vpop.f32.mrb[0].mxu0
      %679 = vmatprep.mubr.bf16.mxu0 0
      %680 = vmatmul.mubr.bf16.gmra.mrb[0].mxu0 %v526
      %v681 = vpop.f32.mrb[0].mxu0
      %v682 = vadd.f32 %v549, %v681
      %v683 = vpop.f32.mrb[0].mxu0
      %v684 = vpop.f32.mrb[0].mxu0
      %v685 = vadd.f32 %v549, %v684
      %v686 = vpop.f32.mrb[0].mxu0
      %687 = vmatprep.mubr.bf16.mxu0 0
      %688 = vmatmul.mubr.bf16.gmra.mrb[0].mxu0 %v527
      %v689 = vpop.f32.mrb[0].mxu0
      %v690 = vadd.f32 %v549, %v689
      %v691 = vpop.f32.mrb[0].mxu0
      %v692 = vpop.f32.mrb[0].mxu0
      %v693 = vadd.f32 %v549, %v692
      %v694 = vpop.f32.mrb[0].mxu0
      %695 = vdwg.mxu0
      %v696 = vmax.f32 %v634, 0.0
      %v697 = vmax.f32 %v637, 0.0
      %v698 = vmax.f32 %v642, 0.0
      %v699 = vmax.f32 %v645, 0.0
      %v700 = vmax.f32 %v650, 0.0
      %v701 = vmax.f32 %v653, 0.0
      %v702 = vmax.f32 %v658, 0.0
      %v703 = vmax.f32 %v661, 0.0
      %v704 = vmax.f32 %v666, 0.0
      %v705 = vmax.f32 %v669, 0.0
      %v706 = vmax.f32 %v674, 0.0
      %v707 = vmax.f32 %v677, 0.0
      %v708 = vmax.f32 %v682, 0.0
      %v709 = vmax.f32 %v685, 0.0
      %v710 = vmax.f32 %v690, 0.0
      %v711 = vmax.f32 %v693, 0.0
      %v712 = vpack.c.bf16 %v697, %v696
      %v713 = vpack.c.bf16 %v699, %v698
      %v714 = vpack.c.bf16 %v701, %v700
      %v715 = vpack.c.bf16 %v703, %v702
      %v716 = vpack.c.bf16 %v705, %v704
      %v717 = vpack.c.bf16 %v707, %v706
      %v718 = vpack.c.bf16 %v709, %v708
      %v719 = vpack.c.bf16 %v711, %v710
      %v720 = vld [vmem:[%s5] sm:$0xf]
      %v721 = vld [vmem:[%s5 + $0x4] sm:$0xf]
      %v722 = vld [vmem:[%s5 + $0x8] sm:$0xf]
      %v723 = vld [vmem:[%s5 + $0xc] sm:$0xf]
      %v724 = vld [vmem:[%s5 + $0x10] sm:$0xf]
      %v725 = vld [vmem:[%s5 + $0x14] sm:$0xf]
      %v726 = vld [vmem:[%s5 + $0x18] sm:$0xf]
      %v727 = vld [vmem:[%s5 + $0x1c] sm:$0xf]
      %v728 = vld [vmem:[%s5 + $0x20] sm:$0xf]
      %v729 = vld [vmem:[%s5 + $0x24] sm:$0xf]
      %v730 = vld [vmem:[%s5 + $0x28] sm:$0xf]
      %v731 = vld [vmem:[%s5 + $0x2c] sm:$0xf]
      %v732 = vld [vmem:[%s5 + $0x30] sm:$0xf]
      %v733 = vld [vmem:[%s5 + $0x34] sm:$0xf]
      %v734 = vld [vmem:[%s5 + $0x38] sm:$0xf]
      %v735 = vld [vmem:[%s5 + $0x3c] sm:$0xf]
      %v736 = vld [vmem:[%s6] sm:$0x1]
      %v738 = vlaneseq
      %v739 = vshrl.u32 %v738, 7
      %v740 = vsub.s32 0, %v739
      %v741 = vrot.slane %v736, %v740
      %v759 = vunpack.c.l.b16 %v720
      %v760 = vunpack.c.l.b16 %v721
      %v761 = vunpack.c.l.b16 %v722
      %v762 = vunpack.c.l.b16 %v723
      %v763 = vunpack.c.l.b16 %v724
      %v764 = vunpack.c.l.b16 %v725
      %v765 = vunpack.c.l.b16 %v726
      %v766 = vunpack.c.l.b16 %v727
      %v767 = vunpack.c.l.b16 %v728
      %v768 = vunpack.c.l.b16 %v729
      %v769 = vunpack.c.l.b16 %v730
      %v770 = vunpack.c.l.b16 %v731
      %v771 = vunpack.c.l.b16 %v732
      %v772 = vunpack.c.l.b16 %v733
      %v773 = vunpack.c.l.b16 %v734
      %v774 = vunpack.c.l.b16 %v735
      %v775 = vpack.c.b16 %v760, %v759
      %v776 = vpack.c.b16 %v762, %v761
      %v777 = vpack.c.b16 %v764, %v763
      %v778 = vpack.c.b16 %v766, %v765
      %v779 = vpack.c.b16 %v768, %v767
      %v780 = vpack.c.b16 %v770, %v769
      %v781 = vpack.c.b16 %v772, %v771
      %v782 = vpack.c.b16 %v774, %v773
      %791 = vmatprep.subr.bf16.mxu0 0
      %792 = vmatpush1.bf16.msra.mxu0 %v775
      %793 = vmatprep.subr.bf16.mxu0 0
      %794 = vmatpush1.bf16.msra.mxu0 %v776
      %795 = vmatprep.subr.bf16.mxu0 0
      %796 = vmatpush1.bf16.msra.mxu0 %v777
      %797 = vmatprep.subr.bf16.mxu0 0
      %798 = vmatpush1.bf16.msra.mxu0 %v778
      %799 = vmatprep.subr.bf16.mxu0 0
      %800 = vmatpush1.bf16.msra.mxu0 %v779
      %801 = vmatprep.subr.bf16.mxu0 0
      %802 = vmatpush1.bf16.msra.mxu0 %v780
      %803 = vmatprep.subr.bf16.mxu0 0
      %804 = vmatpush1.bf16.msra.mxu0 %v781
      %805 = vmatprep.subr.bf16.mxu0 0
      %806 = vmatpush1.bf16.msra.mxu0 %v782
      %807 = vmatprep.subr.bf16.mxu0 0
      %808 = vmatpush1.bf16.msra.mxu0 0
      %809 = vmatprep.subr.bf16.mxu0 0
      %810 = vmatpush1.bf16.msra.mxu0 0
      %811 = vmatprep.subr.bf16.mxu0 0
      %812 = vmatpush1.bf16.msra.mxu0 0
      %813 = vmatprep.subr.bf16.mxu0 0
      %814 = vmatpush1.bf16.msra.mxu0 0
      %815 = vmatprep.subr.bf16.mxu0 0
      %816 = vmatpush1.bf16.msra.mxu0 0
      %817 = vmatprep.subr.bf16.mxu0 0
      %818 = vmatpush1.bf16.msra.mxu0 0
      %819 = vmatprep.subr.bf16.mxu0 0
      %820 = vmatpush1.bf16.msra.mxu0 0
      %821 = vmatprep.subr.bf16.mxu0 0
      %822 = vmatpush1.bf16.msra.mxu0 0
      %823 = vmatprep.mubr.bf16.mxu0 0
      %824 = vmatmul.mubr.bf16.gmra.mrb[0].mxu0 %v712
      %v825 = vpop.f32.mrb[0].mxu0
      %v826 = vadd.f32 %v741, %v825
      %v827 = vpop.f32.mrb[0].mxu0
      %v828 = vpop.f32.mrb[0].mxu0
      %v829 = vadd.f32 %v741, %v828
      %v830 = vpop.f32.mrb[0].mxu0
      %831 = vmatprep.mubr.bf16.mxu0 0
      %832 = vmatmul.mubr.bf16.gmra.mrb[0].mxu0 %v713
      %v833 = vpop.f32.mrb[0].mxu0
      %v834 = vadd.f32 %v741, %v833
      %v835 = vpop.f32.mrb[0].mxu0
      %v836 = vpop.f32.mrb[0].mxu0
      %v837 = vadd.f32 %v741, %v836
      %v838 = vpop.f32.mrb[0].mxu0
      %839 = vmatprep.mubr.bf16.mxu0 0
      %840 = vmatmul.mubr.bf16.gmra.mrb[0].mxu0 %v714
      %v841 = vpop.f32.mrb[0].mxu0
      %v842 = vadd.f32 %v741, %v841
      %v843 = vpop.f32.mrb[0].mxu0
      %v844 = vpop.f32.mrb[0].mxu0
      %v845 = vadd.f32 %v741, %v844
      %v846 = vpop.f32.mrb[0].mxu0
      %847 = vmatprep.mubr.bf16.mxu0 0
      %848 = vmatmul.mubr.bf16.gmra.mrb[0].mxu0 %v715
      %v849 = vpop.f32.mrb[0].mxu0
      %v850 = vadd.f32 %v741, %v849
      %v851 = vpop.f32.mrb[0].mxu0
      %v852 = vpop.f32.mrb[0].mxu0
      %v853 = vadd.f32 %v741, %v852
      %v854 = vpop.f32.mrb[0].mxu0
      %855 = vmatprep.mubr.bf16.mxu0 0
      %856 = vmatmul.mubr.bf16.gmra.mrb[0].mxu0 %v716
      %v857 = vpop.f32.mrb[0].mxu0
      %v858 = vadd.f32 %v741, %v857
      %v859 = vpop.f32.mrb[0].mxu0
      %v860 = vpop.f32.mrb[0].mxu0
      %v861 = vadd.f32 %v741, %v860
      %v862 = vpop.f32.mrb[0].mxu0
      %863 = vmatprep.mubr.bf16.mxu0 0
      %864 = vmatmul.mubr.bf16.gmra.mrb[0].mxu0 %v717
      %v865 = vpop.f32.mrb[0].mxu0
      %v866 = vadd.f32 %v741, %v865
      %v867 = vpop.f32.mrb[0].mxu0
      %v868 = vpop.f32.mrb[0].mxu0
      %v869 = vadd.f32 %v741, %v868
      %v870 = vpop.f32.mrb[0].mxu0
      %871 = vmatprep.mubr.bf16.mxu0 0
      %872 = vmatmul.mubr.bf16.gmra.mrb[0].mxu0 %v718
      %v873 = vpop.f32.mrb[0].mxu0
      %v874 = vadd.f32 %v741, %v873
      %v875 = vpop.f32.mrb[0].mxu0
      %v876 = vpop.f32.mrb[0].mxu0
      %v877 = vadd.f32 %v741, %v876
      %v878 = vpop.f32.mrb[0].mxu0
      %879 = vmatprep.mubr.bf16.mxu0 0
      %880 = vmatmul.mubr.bf16.gmra.mrb[0].mxu0 %v719
      %v881 = vpop.f32.mrb[0].mxu0
      %v882 = vadd.f32 %v741, %v881
      %v883 = vpop.f32.mrb[0].mxu0
      %v884 = vpop.f32.mrb[0].mxu0
      %v885 = vadd.f32 %v741, %v884
      %v886 = vpop.f32.mrb[0].mxu0
      %887 = vdwg.mxu0
      %v888 = vmax.f32 %v826, 0.0
      %v889 = vmax.f32 %v829, 0.0
      %v890 = vmax.f32 %v834, 0.0
      %v891 = vmax.f32 %v837, 0.0
      %v892 = vmax.f32 %v842, 0.0
      %v893 = vmax.f32 %v845, 0.0
      %v894 = vmax.f32 %v850, 0.0
      %v895 = vmax.f32 %v853, 0.0
      %v896 = vmax.f32 %v858, 0.0
      %v897 = vmax.f32 %v861, 0.0
      %v898 = vmax.f32 %v866, 0.0
      %v899 = vmax.f32 %v869, 0.0
      %v900 = vmax.f32 %v874, 0.0
      %v901 = vmax.f32 %v877, 0.0
      %v902 = vmax.f32 %v882, 0.0
      %v903 = vmax.f32 %v885, 0.0
      %v904 = vpack.c.bf16 %v889, %v888
      %v905 = vpack.c.bf16 %v891, %v890
      %v906 = vpack.c.bf16 %v893, %v892
      %v907 = vpack.c.bf16 %v895, %v894
      %v908 = vpack.c.bf16 %v897, %v896
      %v909 = vpack.c.bf16 %v899, %v898
      %v910 = vpack.c.bf16 %v901, %v900
      %v911 = vpack.c.bf16 %v903, %v902
      %v912 = vld [vmem:[%s7] sm:$0xf]
      %v913 = vld [vmem:[%s7 + $0x4] sm:$0xf]
      %v914 = vld [vmem:[%s7 + $0x8] sm:$0xf]
      %v915 = vld [vmem:[%s7 + $0xc] sm:$0xf]
      %v916 = vld [vmem:[%s7 + $0x10] sm:$0xf]
      %v917 = vld [vmem:[%s7 + $0x14] sm:$0xf]
      %v918 = vld [vmem:[%s7 + $0x18] sm:$0xf]
      %v919 = vld [vmem:[%s7 + $0x1c] sm:$0xf]
      %v920 = vld [vmem:[%s7 + $0x20] sm:$0xf]
      %v921 = vld [vmem:[%s7 + $0x24] sm:$0xf]
      %v922 = vld [vmem:[%s7 + $0x28] sm:$0xf]
      %v923 = vld [vmem:[%s7 + $0x2c] sm:$0xf]
      %v924 = vld [vmem:[%s7 + $0x30] sm:$0xf]
      %v925 = vld [vmem:[%s7 + $0x34] sm:$0xf]
      %v926 = vld [vmem:[%s7 + $0x38] sm:$0xf]
      %v927 = vld [vmem:[%s7 + $0x3c] sm:$0xf]
      %v928 = vld [vmem:[%s8] sm:$0x1]
      %v930 = vlaneseq
      %v931 = vshrl.u32 %v930, 7
      %v932 = vsub.s32 0, %v931
      %v933 = vrot.slane %v928, %v932
      %v951 = vunpack.c.l.b16 %v912
      %v952 = vunpack.c.l.b16 %v913
      %v953 = vunpack.c.l.b16 %v914
      %v954 = vunpack.c.l.b16 %v915
      %v955 = vunpack.c.l.b16 %v916
      %v956 = vunpack.c.l.b16 %v917
      %v957 = vunpack.c.l.b16 %v918
      %v958 = vunpack.c.l.b16 %v919
      %v959 = vunpack.c.l.b16 %v920
      %v960 = vunpack.c.l.b16 %v921
      %v961 = vunpack.c.l.b16 %v922
      %v962 = vunpack.c.l.b16 %v923
      %v963 = vunpack.c.l.b16 %v924
      %v964 = vunpack.c.l.b16 %v925
      %v965 = vunpack.c.l.b16 %v926
      %v966 = vunpack.c.l.b16 %v927
      %v967 = vpack.c.b16 %v952, %v951
      %v968 = vpack.c.b16 %v954, %v953
      %v969 = vpack.c.b16 %v956, %v955
      %v970 = vpack.c.b16 %v958, %v957
      %v971 = vpack.c.b16 %v960, %v959
      %v972 = vpack.c.b16 %v962, %v961
      %v973 = vpack.c.b16 %v964, %v963
      %v974 = vpack.c.b16 %v966, %v965
      %983 = vmatprep.subr.bf16.mxu0 0
      %984 = vmatpush1.bf16.msra.mxu0 %v967
      %985 = vmatprep.subr.bf16.mxu0 0
      %986 = vmatpush1.bf16.msra.mxu0 %v968
      %987 = vmatprep.subr.bf16.mxu0 0
      %988 = vmatpush1.bf16.msra.mxu0 %v969
      %989 = vmatprep.subr.bf16.mxu0 0
      %990 = vmatpush1.bf16.msra.mxu0 %v970
      %991 = vmatprep.subr.bf16.mxu0 0
      %992 = vmatpush1.bf16.msra.mxu0 %v971
      %993 = vmatprep.subr.bf16.mxu0 0
      %994 = vmatpush1.bf16.msra.mxu0 %v972
      %995 = vmatprep.subr.bf16.mxu0 0
      %996 = vmatpush1.bf16.msra.mxu0 %v973
      %997 = vmatprep.subr.bf16.mxu0 0
      %998 = vmatpush1.bf16.msra.mxu0 %v974
      %999 = vmatprep.subr.bf16.mxu0 0
      %1000 = vmatpush1.bf16.msra.mxu0 0
      %1001 = vmatprep.subr.bf16.mxu0 0
      %1002 = vmatpush1.bf16.msra.mxu0 0
      %1003 = vmatprep.subr.bf16.mxu0 0
      %1004 = vmatpush1.bf16.msra.mxu0 0
      %1005 = vmatprep.subr.bf16.mxu0 0
      %1006 = vmatpush1.bf16.msra.mxu0 0
      %1007 = vmatprep.subr.bf16.mxu0 0
      %1008 = vmatpush1.bf16.msra.mxu0 0
      %1009 = vmatprep.subr.bf16.mxu0 0
      %1010 = vmatpush1.bf16.msra.mxu0 0
      %1011 = vmatprep.subr.bf16.mxu0 0
      %1012 = vmatpush1.bf16.msra.mxu0 0
      %1013 = vmatprep.subr.bf16.mxu0 0
      %1014 = vmatpush1.bf16.msra.mxu0 0
      %1015 = vmatprep.mubr.bf16.mxu0 0
      %1016 = vmatmul.mubr.bf16.gmra.mrb[0].mxu0 %v904
      %v1017 = vpop.f32.mrb[0].mxu0
      %v1018 = vadd.f32 %v933, %v1017
      %v1019 = vpop.f32.mrb[0].mxu0
      %v1020 = vpop.f32.mrb[0].mxu0
      %v1021 = vadd.f32 %v933, %v1020
      %v1022 = vpop.f32.mrb[0].mxu0
      %1023 = vmatprep.mubr.bf16.mxu0 0
      %1024 = vmatmul.mubr.bf16.gmra.mrb[0].mxu0 %v905
      %v1025 = vpop.f32.mrb[0].mxu0
      %v1026 = vadd.f32 %v933, %v1025
      %v1027 = vpop.f32.mrb[0].mxu0
      %v1028 = vpop.f32.mrb[0].mxu0
      %v1029 = vadd.f32 %v933, %v1028
      %v1030 = vpop.f32.mrb[0].mxu0
      %1031 = vmatprep.mubr.bf16.mxu0 0
      %1032 = vmatmul.mubr.bf16.gmra.mrb[0].mxu0 %v906
      %v1033 = vpop.f32.mrb[0].mxu0
      %v1034 = vadd.f32 %v933, %v1033
      %v1035 = vpop.f32.mrb[0].mxu0
      %v1036 = vpop.f32.mrb[0].mxu0
      %v1037 = vadd.f32 %v933, %v1036
      %v1038 = vpop.f32.mrb[0].mxu0
      %1039 = vmatprep.mubr.bf16.mxu0 0
      %1040 = vmatmul.mubr.bf16.gmra.mrb[0].mxu0 %v907
      %v1041 = vpop.f32.mrb[0].mxu0
      %v1042 = vadd.f32 %v933, %v1041
      %v1043 = vpop.f32.mrb[0].mxu0
      %v1044 = vpop.f32.mrb[0].mxu0
      %v1045 = vadd.f32 %v933, %v1044
      %v1046 = vpop.f32.mrb[0].mxu0
      %1047 = vmatprep.mubr.bf16.mxu0 0
      %1048 = vmatmul.mubr.bf16.gmra.mrb[0].mxu0 %v908
      %v1049 = vpop.f32.mrb[0].mxu0
      %v1050 = vadd.f32 %v933, %v1049
      %v1051 = vpop.f32.mrb[0].mxu0
      %v1052 = vpop.f32.mrb[0].mxu0
      %v1053 = vadd.f32 %v933, %v1052
      %v1054 = vpop.f32.mrb[0].mxu0
      %1055 = vmatprep.mubr.bf16.mxu0 0
      %1056 = vmatmul.mubr.bf16.gmra.mrb[0].mxu0 %v909
      %v1057 = vpop.f32.mrb[0].mxu0
      %v1058 = vadd.f32 %v933, %v1057
      %v1059 = vpop.f32.mrb[0].mxu0
      %v1060 = vpop.f32.mrb[0].mxu0
      %v1061 = vadd.f32 %v933, %v1060
      %v1062 = vpop.f32.mrb[0].mxu0
      %1063 = vmatprep.mubr.bf16.mxu0 0
      %1064 = vmatmul.mubr.bf16.gmra.mrb[0].mxu0 %v910
      %v1065 = vpop.f32.mrb[0].mxu0
      %v1066 = vadd.f32 %v933, %v1065
      %v1067 = vpop.f32.mrb[0].mxu0
      %v1068 = vpop.f32.mrb[0].mxu0
      %v1069 = vadd.f32 %v933, %v1068
      %v1070 = vpop.f32.mrb[0].mxu0
      %1071 = vmatprep.mubr.bf16.mxu0 0
      %1072 = vmatmul.mubr.bf16.gmra.mrb[0].mxu0 %v911
      %v1073 = vpop.f32.mrb[0].mxu0
      %v1074 = vadd.f32 %v933, %v1073
      %v1075 = vpop.f32.mrb[0].mxu0
      %v1076 = vpop.f32.mrb[0].mxu0
      %v1077 = vadd.f32 %v933, %v1076
      %v1078 = vpop.f32.mrb[0].mxu0
      %1079 = vdwg.mxu0
      %vm1080 = vcmask 15360
      %v1081 = vsel %vm1080, %v1018, -inf
      %1082 = vmax.xlane.f32.xlu0 %v1081
      %v1083 = vpop.xlane.xlu0 %1082
      %v1084 = vsel %vm1080, %v1021, -inf
      %1085 = vmax.xlane.f32.xlu0 %v1084
      %v1086 = vpop.xlane.xlu0 %1085
      %v1087 = vsel %vm1080, %v1026, -inf
      %1088 = vmax.xlane.f32.xlu0 %v1087
      %v1089 = vpop.xlane.xlu0 %1088
      %v1090 = vsel %vm1080, %v1029, -inf
      %1091 = vmax.xlane.f32.xlu0 %v1090
      %v1092 = vpop.xlane.xlu0 %1091
      %v1093 = vsel %vm1080, %v1034, -inf
      %1094 = vmax.xlane.f32.xlu0 %v1093
      %v1095 = vpop.xlane.xlu0 %1094
      %v1096 = vsel %vm1080, %v1037, -inf
      %1097 = vmax.xlane.f32.xlu0 %v1096
      %v1098 = vpop.xlane.xlu0 %1097
      %v1099 = vsel %vm1080, %v1042, -inf
      %1100 = vmax.xlane.f32.xlu0 %v1099
      %v1101 = vpop.xlane.xlu0 %1100
      %v1102 = vsel %vm1080, %v1045, -inf
      %1103 = vmax.xlane.f32.xlu0 %v1102
      %v1104 = vpop.xlane.xlu0 %1103
      %v1105 = vsel %vm1080, %v1050, -inf
      %1106 = vmax.xlane.f32.xlu0 %v1105
      %v1107 = vpop.xlane.xlu0 %1106
      %v1108 = vsel %vm1080, %v1053, -inf
      %1109 = vmax.xlane.f32.xlu0 %v1108
      %v1110 = vpop.xlane.xlu0 %1109
      %v1111 = vsel %vm1080, %v1058, -inf
      %1112 = vmax.xlane.f32.xlu0 %v1111
      %v1113 = vpop.xlane.xlu0 %1112
      %v1114 = vsel %vm1080, %v1061, -inf
      %1115 = vmax.xlane.f32.xlu0 %v1114
      %v1116 = vpop.xlane.xlu0 %1115
      %v1117 = vsel %vm1080, %v1066, -inf
      %1118 = vmax.xlane.f32.xlu0 %v1117
      %v1119 = vpop.xlane.xlu0 %1118
      %v1120 = vsel %vm1080, %v1069, -inf
      %1121 = vmax.xlane.f32.xlu0 %v1120
      %v1122 = vpop.xlane.xlu0 %1121
      %v1123 = vsel %vm1080, %v1074, -inf
      %1124 = vmax.xlane.f32.xlu0 %v1123
      %v1125 = vpop.xlane.xlu0 %1124
      %v1126 = vsel %vm1080, %v1077, -inf
      %1127 = vmax.xlane.f32.xlu0 %v1126
      %v1128 = vpop.xlane.xlu0 %1127
      %v1129 = vsub.f32 %v1018, %v1083
      %v1130 = vsub.f32 %v1021, %v1086
      %v1131 = vsub.f32 %v1026, %v1089
      %v1132 = vsub.f32 %v1029, %v1092
      %v1133 = vsub.f32 %v1034, %v1095
      %v1134 = vsub.f32 %v1037, %v1098
      %v1135 = vsub.f32 %v1042, %v1101
      %v1136 = vsub.f32 %v1045, %v1104
      %v1137 = vsub.f32 %v1050, %v1107
      %v1138 = vsub.f32 %v1053, %v1110
      %v1139 = vsub.f32 %v1058, %v1113
      %v1140 = vsub.f32 %v1061, %v1116
      %v1141 = vsub.f32 %v1066, %v1119
      %v1142 = vsub.f32 %v1069, %v1122
      %v1143 = vsub.f32 %v1074, %v1125
      %v1144 = vsub.f32 %v1077, %v1128
      %v1145 = vmul.f32 %v1129, 1.442695
      %v1146 = vpow.pop %v1145
      %v1147 = vmul.f32 %v1130, 1.442695
      %v1148 = vpow.pop %v1147
      %v1149 = vmul.f32 %v1131, 1.442695
      %v1150 = vpow.pop %v1149
      %v1151 = vmul.f32 %v1132, 1.442695
      %v1152 = vpow.pop %v1151
      %v1153 = vmul.f32 %v1133, 1.442695
      %v1154 = vpow.pop %v1153
      %v1155 = vmul.f32 %v1134, 1.442695
      %v1156 = vpow.pop %v1155
      %v1157 = vmul.f32 %v1135, 1.442695
      %v1158 = vpow.pop %v1157
      %v1159 = vmul.f32 %v1136, 1.442695
      %v1160 = vpow.pop %v1159
      %v1161 = vmul.f32 %v1137, 1.442695
      %v1162 = vpow.pop %v1161
      %v1163 = vmul.f32 %v1138, 1.442695
      %v1164 = vpow.pop %v1163
      %v1165 = vmul.f32 %v1139, 1.442695
      %v1166 = vpow.pop %v1165
      %v1167 = vmul.f32 %v1140, 1.442695
      %v1168 = vpow.pop %v1167
      %v1169 = vmul.f32 %v1141, 1.442695
      %v1170 = vpow.pop %v1169
      %v1171 = vmul.f32 %v1142, 1.442695
      %v1172 = vpow.pop %v1171
      %v1173 = vmul.f32 %v1143, 1.442695
      %v1174 = vpow.pop %v1173
      %v1175 = vmul.f32 %v1144, 1.442695
      %v1176 = vpow.pop %v1175
      %v1177 = vsel %vm1080, %v1146, 0.0
      %1178 = vadd.xlane.f32.xlu0 %v1177
      %v1179 = vpop.xlane.xlu0 %1178
      %v1180 = vsel %vm1080, %v1148, 0.0
      %1181 = vadd.xlane.f32.xlu0 %v1180
      %v1182 = vpop.xlane.xlu0 %1181
      %v1183 = vsel %vm1080, %v1150, 0.0
      %1184 = vadd.xlane.f32.xlu0 %v1183
      %v1185 = vpop.xlane.xlu0 %1184
      %v1186 = vsel %vm1080, %v1152, 0.0
      %1187 = vadd.xlane.f32.xlu0 %v1186
      %v1188 = vpop.xlane.xlu0 %1187
      %v1189 = vsel %vm1080, %v1154, 0.0
      %1190 = vadd.xlane.f32.xlu0 %v1189
      %v1191 = vpop.xlane.xlu0 %1190
      %v1192 = vsel %vm1080, %v1156, 0.0
      %1193 = vadd.xlane.f32.xlu0 %v1192
      %v1194 = vpop.xlane.xlu0 %1193
      %v1195 = vsel %vm1080, %v1158, 0.0
      %1196 = vadd.xlane.f32.xlu0 %v1195
      %v1197 = vpop.xlane.xlu0 %1196
      %v1198 = vsel %vm1080, %v1160, 0.0
      %1199 = vadd.xlane.f32.xlu0 %v1198
      %v1200 = vpop.xlane.xlu0 %1199
      %v1201 = vsel %vm1080, %v1162, 0.0
      %1202 = vadd.xlane.f32.xlu0 %v1201
      %v1203 = vpop.xlane.xlu0 %1202
      %v1204 = vsel %vm1080, %v1164, 0.0
      %1205 = vadd.xlane.f32.xlu0 %v1204
      %v1206 = vpop.xlane.xlu0 %1205
      %v1207 = vsel %vm1080, %v1166, 0.0
      %1208 = vadd.xlane.f32.xlu0 %v1207
      %v1209 = vpop.xlane.xlu0 %1208
      %v1210 = vsel %vm1080, %v1168, 0.0
      %1211 = vadd.xlane.f32.xlu0 %v1210
      %v1212 = vpop.xlane.xlu0 %1211
      %v1213 = vsel %vm1080, %v1170, 0.0
      %1214 = vadd.xlane.f32.xlu0 %v1213
      %v1215 = vpop.xlane.xlu0 %1214
      %v1216 = vsel %vm1080, %v1172, 0.0
      %1217 = vadd.xlane.f32.xlu0 %v1216
      %v1218 = vpop.xlane.xlu0 %1217
      %v1219 = vsel %vm1080, %v1174, 0.0
      %1220 = vadd.xlane.f32.xlu0 %v1219
      %v1221 = vpop.xlane.xlu0 %1220
      %v1222 = vsel %vm1080, %v1176, 0.0
      %1223 = vadd.xlane.f32.xlu0 %v1222
      %v1224 = vpop.xlane.xlu0 %1223
      %v1225 = vrcp.pop %v1179
      %v1226 = vrcp.pop %v1182
      %v1227 = vrcp.pop %v1185
      %v1228 = vrcp.pop %v1188
      %v1229 = vrcp.pop %v1191
      %v1230 = vrcp.pop %v1194
      %v1231 = vrcp.pop %v1197
      %v1232 = vrcp.pop %v1200
      %v1233 = vrcp.pop %v1203
      %v1234 = vrcp.pop %v1206
      %v1235 = vrcp.pop %v1209
      %v1236 = vrcp.pop %v1212
      %v1237 = vrcp.pop %v1215
      %v1238 = vrcp.pop %v1218
      %v1239 = vrcp.pop %v1221
      %v1240 = vrcp.pop %v1224
      %v1241 = vmul.f32 %v1146, %v1225
      %v1242 = vmul.f32 %v1148, %v1226
      %v1243 = vmul.f32 %v1150, %v1227
      %v1244 = vmul.f32 %v1152, %v1228
      %v1245 = vmul.f32 %v1154, %v1229
      %v1246 = vmul.f32 %v1156, %v1230
      %v1247 = vmul.f32 %v1158, %v1231
      %v1248 = vmul.f32 %v1160, %v1232
      %v1249 = vmul.f32 %v1162, %v1233
      %v1250 = vmul.f32 %v1164, %v1234
      %v1251 = vmul.f32 %v1166, %v1235
      %v1252 = vmul.f32 %v1168, %v1236
      %v1253 = vmul.f32 %v1170, %v1237
      %v1254 = vmul.f32 %v1172, %v1238
      %v1255 = vmul.f32 %v1174, %v1239
      %v1256 = vmul.f32 %v1176, %v1240
      %1257 = vst.msk [vmem:[%s334] sm:$0xff] %vm1080, %v1241
      %1258 = vst.msk [vmem:[%s334 + $0x8] sm:$0xff] %vm1080, %v1242
      %1259 = vst.msk [vmem:[%s334 + $0x10] sm:$0xff] %vm1080, %v1243
      %1260 = vst.msk [vmem:[%s334 + $0x18] sm:$0xff] %vm1080, %v1244
      %1261 = vst.msk [vmem:[%s334 + $0x20] sm:$0xff] %vm1080, %v1245
      %1262 = vst.msk [vmem:[%s334 + $0x28] sm:$0xff] %vm1080, %v1246
      %1263 = vst.msk [vmem:[%s334 + $0x30] sm:$0xff] %vm1080, %v1247
      %1264 = vst.msk [vmem:[%s334 + $0x38] sm:$0xff] %vm1080, %v1248
      %1265 = vst.msk [vmem:[%s334 + $0x40] sm:$0xff] %vm1080, %v1249
      %1266 = vst.msk [vmem:[%s334 + $0x48] sm:$0xff] %vm1080, %v1250
      %1267 = vst.msk [vmem:[%s334 + $0x50] sm:$0xff] %vm1080, %v1251
      %1268 = vst.msk [vmem:[%s334 + $0x58] sm:$0xff] %vm1080, %v1252
      %1269 = vst.msk [vmem:[%s334 + $0x60] sm:$0xff] %vm1080, %v1253
      %1270 = vst.msk [vmem:[%s334 + $0x68] sm:$0xff] %vm1080, %v1254
      %1271 = vst.msk [vmem:[%s334 + $0x70] sm:$0xff] %vm1080, %v1255
      %1272 = vst.msk [vmem:[%s334 + $0x78] sm:$0xff] %vm1080, %v1256
      %s1273 = smul.u32 16, %s20
      %p1274 = scmp.lt.s32.totalorder %s1273, 31
      %s1275 = scalar_select %p1274, %s1273, 31
      %s1276 = smul.addr %s1275, 8
      %s1277 = scalar_lea.vmem %s9, %s1276
      // Predicated region
      $region57: #{mymodule8_forward.1} parent=55 // pred_check
        %p1278 = pneg %p232
      $region58: #{mymodule8_forward.1} parent=55 // pred_check_branch
        %1280 = sbr.rel (%p1278) target = $region60
      $region59: #{mymodule8_forward.1} parent=55 // pred_region
        %s1281 = smul.u32 16, %s20
      $region60: #{mymodule8_forward.1} parent=55 // pred_fallthru
        _
    $region56: #{mymodule8_forward.1} parent=5 // pred_fallthru
      _
    %p1282 = scmp.le.s32.totalorder 2, %s15
    // Predicated region
    $region61: #{mymodule8_forward.1} parent=5 // pred_check
      %p1283 = pneg %p1282
    $region62: #{mymodule8_forward.1} parent=5 // pred_check_branch
      %1285 = sbr.rel (%p1283) target = $region64
    $region63: #{mymodule8_forward.1} parent=5 // pred_region
      %s1286 = ssub.s32 %s15, 2
      // Predicated region
      $region65: #{mymodule8_forward.1} parent=63 // pred_check
        %p1287 = pneg %p238
      $region66: #{mymodule8_forward.1} parent=63 // pred_check_branch
        %1289 = sbr.rel (%p1287) target = $region68
      $region67: #{mymodule8_forward.1} parent=63 // pred_region
        %s1290 = smul.u32 16, %s21
        %p1291 = scmp.lt.s32.totalorder %s1290, 31
        %s1292 = scalar_select %p1291, %s1290, 31
        %s1293 = smul.addr %s1292, 8
        %s1294 = scalar_lea.vmem %s9, %s1293
      $region68: #{mymodule8_forward.1} parent=63 // pred_fallthru
        _
    $region64: #{mymodule8_forward.1} parent=5 // pred_fallthru
      _
  $region6: #{mymodule8_forward.1} parent=0 // loop_footer
    %s19 = sadd.s32 1, %s15
  $region7: #{mymodule8_forward.1} parent=0 // loop_footer_branch
    %14 = sbr.rel target = $region3
  $region8: #{mymodule8_forward.1} parent=0 // loop_exit
    _

</llo_original>
